<compile_context>
chip_gen: v7x
topology: tpu7x:2x2x1
jax: 0.10.0
libtpu: 0.0.40
codegen_flags: <defaults>
</compile_context>

<pallas_src>
import functools

import jax
import jax.numpy as jnp
from jax.experimental import pallas as pl
from jax.experimental.pallas import tpu as pltpu

_LANES = 128
_SUBLANES = 8
# ~4 MiB per input per grid step -> ~16 MiB of double-buffered cmap tiles.
_TARGET_TILE_BYTES = 4 * 1024 * 1024


def _build_sse_kernel(bs, npts, br, bc, acc_rows, acc_lanes,
                      need_row_mask, need_col_mask):
    """Sum-of-squared-error reduction kernel over a (nr, nc) block grid."""

    def kernel(gt_ref, hat_ref, out_ref, acc_ref):
        i = pl.program_id(0)
        j = pl.program_id(1)

        @pl.when(jnp.logical_and(i == 0, j == 0))
        def _init():
            acc_ref[...] = jnp.zeros_like(acc_ref)

        diff = gt_ref[...].astype(jnp.float32) - hat_ref[...].astype(jnp.float32)
        sq = diff * diff

        # Mask out-of-bounds rows/cols of the ragged last block (static shapes:
        # the mask code is only emitted when a tail actually exists).
        if need_row_mask or need_col_mask:
            mask = None
            if need_row_mask:
                rows = jax.lax.broadcasted_iota(jnp.int32, (br, bc), 0) + i * br
                mask = rows < bs
            if need_col_mask:
                cols = jax.lax.broadcasted_iota(jnp.int32, (br, bc), 1) + j * bc
                cmask = cols < npts
                mask = cmask if mask is None else jnp.logical_and(mask, cmask)
            sq = jnp.where(mask, sq, 0.0)

        # Lane fold: (br, bc) -> (br, 128) via whole-vreg adds (VALU only).
        if bc > _LANES:
            sq = sq.reshape(br, bc // _LANES, _LANES).sum(axis=1)

        if acc_rows == _SUBLANES:
            # Sublane-aligned row block: vreg-aligned adds into (8, lanes);
            # the cross-sublane/lane reduce happens once, in finalize.
            acc_ref[...] += sq.reshape(br // _SUBLANES, _SUBLANES, acc_lanes).sum(axis=0)
        else:
            acc_ref[...] += jnp.sum(sq, axis=0, keepdims=True)

        @pl.when(jnp.logical_and(i == pl.num_programs(0) - 1,
                                 j == pl.num_programs(1) - 1))
        def _finalize():
            out_ref[0] = jnp.sum(acc_ref[...])

    return kernel


def _sum_squared_error(gt, hat, tile_bytes):
    """sum((gt - hat)^2) over a 2-D (bs, npts) pair, streamed in native dtype."""
    bs, npts = gt.shape
    itemsize = max(gt.dtype.itemsize, hat.dtype.itemsize)
    target_elems = max(_SUBLANES * _LANES, tile_bytes // itemsize)

    # Row blocking: keep all rows resident per tile when they fit (batch is
    # typically small, so nr == 1); otherwise split on sublane-aligned chunks.
    if bs * _LANES <= target_elems:
        br, nr = bs, 1
    else:
        br = max(_SUBLANES, ((target_elems // _LANES) // _SUBLANES) * _SUBLANES)
        nr = pl.cdiv(bs, br)

    # Column blocking: lane-aligned and right-sized so tail padding per block
    # is < 128 lanes (review: avoid ~2x over-padding on a bandwidth-bound op).
    if npts <= _LANES:
        bc, nc = npts, 1
    else:
        cols128 = pl.cdiv(npts, _LANES) * _LANES
        bc_cap = max(_LANES, ((target_elems // br) // _LANES) * _LANES)
        nc = pl.cdiv(cols128, bc_cap)
        bc = pl.cdiv(pl.cdiv(cols128, nc), _LANES) * _LANES

    need_row_mask = (nr * br != bs)
    need_col_mask = (nc * bc != npts)

    acc_rows = _SUBLANES if (br % _SUBLANES == 0 and br >= _SUBLANES) else 1
    acc_lanes = _LANES if bc % _LANES == 0 else bc

    kernel = _build_sse_kernel(bs, npts, br, bc, acc_rows, acc_lanes,
                               need_row_mask, need_col_mask)

    cost = pl.CostEstimate(
        flops=3 * bs * npts + 2,
        transcendentals=0,
        bytes_accessed=bs * npts * (gt.dtype.itemsize + hat.dtype.itemsize) + 4,
    )

    out = pl.pallas_call(
        kernel,
        out_shape=jax.ShapeDtypeStruct((1,), jnp.float32),
        grid_spec=pltpu.PrefetchScalarGridSpec(
            num_scalar_prefetch=0,
            grid=(nr, nc),
            in_specs=[
                pl.BlockSpec((br, bc), lambda i, j: (i, j)),   # cmap_gt tile
                pl.BlockSpec((br, bc), lambda i, j: (i, j)),   # cmap_hat tile
            ],
            out_specs=pl.BlockSpec(memory_space=pltpu.MemorySpace.SMEM),
            scratch_shapes=[pltpu.VMEM((acc_rows, acc_lanes), jnp.float32)],
        ),
        compiler_params=pltpu.CompilerParams(
            dimension_semantics=("arbitrary", "arbitrary"),
            vmem_limit_bytes=32 * 1024 * 1024),
        cost_estimate=cost,
    )(gt, hat)
    return out[0]


@functools.partial(jax.jit, static_argnames=("tile_bytes",))
def vae_criterion_forward(means, logvars, cmap_values_gt, cmap_values_hat,
                          weights, *, tile_bytes=_TARGET_TILE_BYTES):
    # KLD term: B*D elements -> plain jnp, trivially fused by XLA (review:
    # dropping the latent slab from the kernel deletes a DMA stream entirely).
    m = means.astype(jnp.float32)
    lv = logvars.astype(jnp.float32)
    loss_kld = -0.5 * jnp.mean(jnp.sum(1.0 + lv - m * m - jnp.exp(lv), axis=-1))

    # Mirror of torch .view(bs, npts): metadata-only reshape, no HBM copy.
    bs = cmap_values_gt.shape[0]
    gt = jnp.reshape(cmap_values_gt, (bs, -1))
    hat = jnp.reshape(cmap_values_hat, (bs, -1))
    npts = gt.shape[1]

    # The only heavyweight reduction: streamed sum of squared error in Pallas.
    sum_sq = _sum_squared_error(gt, hat, tile_bytes)
    loss_recon = jnp.sqrt(sum_sq / jnp.float32(bs * npts))

    weights = weights.astype(jnp.float32)
    lw_recon, lw_kld = weights[0], weights[1]
    loss = lw_kld * loss_kld + lw_recon * loss_recon
    return loss, loss_recon, loss_kld


class VAECriterion:
    """Plain-Python port of the PyTorch module; forward runs the Pallas kernel."""

    def __init__(self, lw_init_recon, lw_init_kld, ann_temp, batchsize, ann_per_epochs=1):
        self.lw_recon = lw_init_recon
        self.lw_kld = lw_init_kld
        self.ann_temp = ann_temp
        self.batchsize = batchsize
        self.iter_counter = 0
        self.ann_per_epochs = ann_per_epochs

    def forward(self, means, logvars, cmap_values_gt, cmap_values_hat):
        # Weights travel as a runtime (2,) array -> no retrace when lw_kld anneals.
        weights = jnp.array([self.lw_recon, self.lw_kld], dtype=jnp.float32)
        return vae_criterion_forward(means, logvars, cmap_values_gt,
                                     cmap_values_hat, weights)

    __call__ = forward

    @staticmethod
    def metrics(cmap_values_gt, cmap_values_hat):
        return jnp.sqrt(jnp.mean(jnp.square(cmap_values_gt - cmap_values_hat)))

    def apply_iter(self):
        if self.iter_counter % self.ann_per_epochs == self.ann_per_epochs - 1:
            self.lw_kld *= self.ann_temp
        self.iter_counter += 1


def _reference(means, logvars, gt, hat, lw_recon, lw_kld):
    loss_kld = -0.5 * jnp.sum(1 + logvars - means ** 2 - jnp.exp(logvars), axis=-1).mean()
    loss_recon = jnp.sqrt(jnp.mean(jnp.square(gt - hat)))
    loss = lw_kld * loss_kld + lw_recon * loss_recon
    return loss, loss_recon, loss_kld


if __name__ == "__main__":
    lw_init_recon = 1.0
    lw_init_kld = 0.1
    ann_temp = 0.5
    B = 2        # batchsize
    D = 32       # latent dimension (means / logvars)
    N = 128      # number of contact-map points

    key = jax.random.PRNGKey(0)
    k1, k2, k3, k4 = jax.random.split(key, 4)
    means = jax.random.normal(k1, (B, D), dtype=jnp.float32)
    logvars = 0.1 * jax.random.normal(k2, (B, D), dtype=jnp.float32)
    cmap_gt = jax.random.uniform(k3, (B, N), dtype=jnp.float32)
    cmap_hat = jax.random.uniform(k4, (B, N), dtype=jnp.float32)

    crit = VAECriterion(lw_init_recon, lw_init_kld, ann_temp, batchsize=B)

    # First call.
    loss, loss_recon, loss_kld = crit.forward(means, logvars, cmap_gt, cmap_hat)
    jax.block_until_ready((loss, loss_recon, loss_kld))
    ref = _reference(means, logvars, cmap_gt, cmap_hat, crit.lw_recon, crit.lw_kld)
    assert jnp.allclose(loss, ref[0], rtol=1e-5, atol=1e-5)
    assert jnp.allclose(loss_recon, ref[1], rtol=1e-5, atol=1e-5)
    assert jnp.allclose(loss_kld, ref[2], rtol=1e-5, atol=1e-5)

    # Anneal lw_kld and call again: same compiled kernel, new runtime weight.
    crit.apply_iter()
    loss2, loss_recon2, loss_kld2 = crit.forward(means, logvars, cmap_gt, cmap_hat)
    jax.block_until_ready((loss2, loss_recon2, loss_kld2))
    ref2 = _reference(means, logvars, cmap_gt, cmap_hat, crit.lw_recon, crit.lw_kld)
    assert jnp.allclose(loss2, ref2[0], rtol=1e-5, atol=1e-5)
    assert jnp.allclose(loss_recon2, ref2[1], rtol=1e-5, atol=1e-5)
    assert jnp.allclose(loss_kld2, ref2[2], rtol=1e-5, atol=1e-5)

    print("KERNEL_OK")
</pallas_src>

<mosaic_0001>
module attributes {stable_mosaic.version = 11 : i64} {
  func.func @kernel(%arg0: i32, %arg1: i32, %arg2: memref<2x128xf32, #tpu.memory_space<vmem>>, %arg3: memref<2x128xf32, #tpu.memory_space<vmem>>, %arg4: memref<1xf32, #tpu.memory_space<smem>>, %arg5: memref<1x128xf32, #tpu.memory_space<vmem>>) attributes {dimension_semantics = [#tpu.dimension_semantics<arbitrary>, #tpu.dimension_semantics<arbitrary>], iteration_bounds = array<i64: 1, 1>, scalar_prefetch = 0 : i64, scratch_operands = 1 : i64, tpu.core_type = #tpu.core_type<tc>, window_params = [{transform_indices = @transform_0, window_bounds = array<i64: 2, 128>}, {transform_indices = @transform_1, window_bounds = array<i64: 2, 128>}, {transform_indices = @transform_2, window_bounds = array<i64: 1>}]} {
    %c0_i32 = arith.constant 0 : i32
    %0 = arith.cmpi eq, %arg0, %c0_i32 : i32
    %c0_i32_0 = arith.constant 0 : i32
    %1 = arith.cmpi eq, %arg1, %c0_i32_0 : i32
    %2 = arith.andi %0, %1 : i1
    %3 = arith.extui %2 : i1 to i32
    %c0_i32_1 = arith.constant 0 : i32
    %4 = arith.cmpi ne, %3, %c0_i32_1 : i32
    scf.if %4 {
      %cst_12 = arith.constant 0.000000e+00 : f32
      %19 = vector.broadcast %cst_12 : f32 to vector<1x128xf32>
      %c0_13 = arith.constant 0 : index
      %c0_14 = arith.constant 0 : index
      %20 = vector.load %arg5[%c0_13, %c0_14] : memref<1x128xf32, #tpu.memory_space<vmem>>, vector<1x128xf32>
      tpu.vector_store %arg5[%c0_13, %c0_14], %19 {strides = array<i32>} : memref<1x128xf32, #tpu.memory_space<vmem>>, vector<1x128xf32>,
    } else {
    }
    %c0 = arith.constant 0 : index
    %c0_2 = arith.constant 0 : index
    %5 = vector.load %arg2[%c0, %c0_2] : memref<2x128xf32, #tpu.memory_space<vmem>>, vector<2x128xf32>
    %c0_3 = arith.constant 0 : index
    %c0_4 = arith.constant 0 : index
    %6 = vector.load %arg3[%c0_3, %c0_4] : memref<2x128xf32, #tpu.memory_space<vmem>>, vector<2x128xf32>
    %7 = arith.subf %5, %6 : vector<2x128xf32>
    %8 = arith.mulf %7, %7 : vector<2x128xf32>
    %c0_5 = arith.constant 0 : index
    %c0_6 = arith.constant 0 : index
    %9 = vector.load %arg5[%c0_5, %c0_6] : memref<1x128xf32, #tpu.memory_space<vmem>>, vector<1x128xf32>
    %cst = arith.constant dense<0.000000e+00> : vector<128xf32>
    %10 = vector.multi_reduction <add>, %8, %cst [0] : vector<2x128xf32> to vector<128xf32>
    %11 = vector.shape_cast %10 : vector<128xf32> to vector<1x128xf32>
    %12 = arith.addf %9, %11 : vector<1x128xf32>
    %c0_7 = arith.constant 0 : index
    %c0_8 = arith.constant 0 : index
    %13 = vector.load %arg5[%c0_7, %c0_8] : memref<1x128xf32, #tpu.memory_space<vmem>>, vector<1x128xf32>
    tpu.vector_store %arg5[%c0_7, %c0_8], %12 {strides = array<i32>} : memref<1x128xf32, #tpu.memory_space<vmem>>, vector<1x128xf32>,
    %c0_i32_9 = arith.constant 0 : i32
    %14 = arith.cmpi eq, %arg0, %c0_i32_9 : i32
    %c0_i32_10 = arith.constant 0 : i32
    %15 = arith.cmpi eq, %arg1, %c0_i32_10 : i32
    %16 = arith.andi %14, %15 : i1
    %17 = arith.extui %16 : i1 to i32
    %c0_i32_11 = arith.constant 0 : i32
    %18 = arith.cmpi ne, %17, %c0_i32_11 : i32
    scf.if %18 {
      %c0_12 = arith.constant 0 : index
      %c0_13 = arith.constant 0 : index
      %19 = vector.load %arg5[%c0_12, %c0_13] : memref<1x128xf32, #tpu.memory_space<vmem>>, vector<1x128xf32>
      %20 = vector.shape_cast %19 : vector<1x128xf32> to vector<1x1x128xf32>
      %cst_14 = arith.constant dense<0.000000e+00> : vector<1xf32>
      %21 = vector.multi_reduction <add>, %20, %cst_14 [1, 2] : vector<1x1x128xf32> to vector<1xf32>
      %22 = vector.shape_cast %21 : vector<1xf32> to vector<1x1x1xf32>
      %23 = vector.extract %22[0, 0, 0] : f32 from vector<1x1x1xf32>
      %c0_15 = arith.constant 0 : index
      %24 = memref.load %arg4[%c0_15] : memref<1xf32, #tpu.memory_space<smem>>
      memref.store %23, %arg4[%c0_15] : memref<1xf32, #tpu.memory_space<smem>>
    } else {
    }
    return
  }
  func.func @transform_0(%arg0: i32, %arg1: i32) -> (i32, i32) {
    %c0_i32 = arith.constant 0 : i32
    return %arg0, %arg1 : i32, i32
  }
  func.func @transform_1(%arg0: i32, %arg1: i32) -> (i32, i32) {
    %c0_i32 = arith.constant 0 : i32
    return %arg0, %arg1 : i32, i32
  }
  func.func @transform_2(%arg0: i32, %arg1: i32) -> i32 {
    %c0_i32 = arith.constant 0 : i32
    %c0_i32_0 = arith.constant 0 : i32
    return %c0_i32 : i32
  }
}

</mosaic_0001>

<llo_original>
// kernel: vae_criterion_forward.1
$region0: #{vae_criterion_forward.1}
  #allocation0 [shape = 'u32[]', space=smem, size = 0x4, offset = 0x4, fixed_abs, tag = 'smem constant byte address 0x4 - core index']
  #allocation1 [shape = 'u32[144,128]{1,0:T(1,128)}', space=vmem, size = 0x12000, scoped, tag = 'internal scratch']
  #allocation2 [shape = 'f32[1,128]{1,0:T(1,128)}', space=vmem, size = 0x200, scoped, tag = 'scratch operand']
  %s0 = inlined_call_operand.vmem [shape: f32[2,128], index: 0, kind: input, shape index: {}]
  %s1 = inlined_call_operand.vmem [shape: f32[2,128], index: 1, kind: input, shape index: {}]
  %s2 = inlined_call_operand.hbm [shape: f32[1], index: 2, kind: output, shape index: {}]
  %s3 = sld [smem:[#allocation0]]
  $region26: #{vae_criterion_forward.1} parent=0
    _
  %s5 = ssub.s32 1, %s3
  %s6 = scalar_select 0, %s5, %s3
  $region1: #{vae_criterion_forward.1} parent=0
    #allocation3 [shape = 'u8[512]{0}', space=smem, size = 0x200, scoped, tag = 'output window, operand 0, single buffered']
    #allocation4 [shape = 's32[1]{0}', space=sflag, size = 0x4, scoped, tag = 'scoped memory for vae_criterion_forward.1']
    %7 = vsyncpa [#allocation4], 0
    // Predicated region
    $region2: #{vae_criterion_forward.1} parent=1 // pred_check
      _
    $region3: #{vae_criterion_forward.1} parent=1 // pred_check_branch
      %9 = sbr.rel (0) target = $region5
    $region4: #{vae_criterion_forward.1} parent=1 // pred_region
      _
    $region5: #{vae_criterion_forward.1} parent=1 // pred_fallthru
      _
    // Predicated region
    $region6: #{vae_criterion_forward.1} parent=1 // pred_check
      _
    $region7: #{vae_criterion_forward.1} parent=1 // pred_check_branch
      %11 = sbr.rel (0) target = $region9
    $region8: #{vae_criterion_forward.1} parent=1 // pred_region
      _
    $region9: #{vae_criterion_forward.1} parent=1 // pred_fallthru
      _
    %p12 = scmp.eq.s32.totalorder 0, 0
    %p13 = scmp.eq.s32.totalorder 0, 0
    %p14 = pnand %p12, %p13
    %p15 = pneg %p14
    // Predicated region
    $region10: #{vae_criterion_forward.1} parent=1 // pred_check
      _
    $region11: #{vae_criterion_forward.1} parent=1 // pred_check_branch
      %17 = sbr.rel (%p14) target = $region13
    $region12: #{vae_criterion_forward.1} parent=1 // pred_region
      %18 = vst [vmem:[#allocation2] sm:$0x1] 0.0
    $region13: #{vae_criterion_forward.1} parent=1 // pred_fallthru
      _
    %v19 = vld [vmem:[%s0] sm:$0x3]
    %v20 = vld [vmem:[%s1] sm:$0x3]
    %v21 = vsub.f32 %v19, %v20
    %v22 = vmul.f32 %v21, %v21
    %v23 = vld [vmem:[#allocation2] sm:$0x1]
    %vm24 = vcmask 1041408
    %v25 = vsel %vm24, %v22, 0.0
    %v26 = vrot.slane %v25, 4
    %v27 = vadd.f32 %v25, %v26
    %v28 = vrot.slane %v27, 2
    %v29 = vadd.f32 %v27, %v28
    %v30 = vrot.slane %v29, 1
    %v31 = vadd.f32 %v29, %v30
    %v32 = vadd.f32 %v23, %v31
    %33 = vst [vmem:[#allocation2] sm:$0x1] %v32
    // Predicated region
    $region14: #{vae_criterion_forward.1} parent=1 // pred_check
      _
    $region15: #{vae_criterion_forward.1} parent=1 // pred_check_branch
      %35 = sbr.rel (%p14) target = $region17
    $region16: #{vae_criterion_forward.1} parent=1 // pred_region
      %v36 = vld [vmem:[#allocation2] sm:$0x1]
      %vm37 = vcmask 1040384
      %v38 = vsel %vm37, %v36, 0.0
      %39 = vadd.xlane.f32.xlu0 %v38
      %v40 = vpop.xlane.xlu0 %39
      %v41 = vrot.slane %v40, 4
      %v42 = vadd.f32 %v40, %v41
      %v43 = vrot.slane %v42, 2
      %v44 = vadd.f32 %v42, %v43
      %v45 = vrot.slane %v44, 1
      %v46 = vadd.f32 %v44, %v45
      %s47 = vtos %v46
      %s48 = scalar_lea.smem [#allocation3], 0
      %49 = sst [smem:[%s48]] %s47
    $region17: #{vae_criterion_forward.1} parent=1 // pred_fallthru
      _
    // Predicated region
    $region18: #{vae_criterion_forward.1} parent=1 // pred_check
      _
    $region19: #{vae_criterion_forward.1} parent=1 // pred_check_branch
      %51 = sbr.rel (0) target = $region21
    $region20: #{vae_criterion_forward.1} parent=1 // pred_region
      %s53 = ssub.s32 16, 16
      %54 = vsyncadd [#allocation4], %s53
      %57 = dma.smem_to_hbm [#allocation3], 16, %s2, [#allocation4]
    $region21: #{vae_criterion_forward.1} parent=1 // pred_fallthru
      _
    // Predicated region
    $region22: #{vae_criterion_forward.1} parent=1 // pred_check
      _
    $region23: #{vae_criterion_forward.1} parent=1 // pred_check_branch
      %59 = sbr.rel (0) target = $region25
    $region24: #{vae_criterion_forward.1} parent=1 // pred_region
      %60 = dma.done [#allocation4], 16
    $region25: #{vae_criterion_forward.1} parent=1 // pred_fallthru
      _
    %61 = sfence
    %62 = vsyncpa [#allocation4], 1

</llo_original>
